<compile_context>
chip_gen: v7x
topology: tpu7x:2x2x1
jax: 0.10.0
libtpu: 0.0.40
codegen_flags: <defaults>
</compile_context>

<pallas_src>
import functools
import math

import jax
import jax.numpy as jnp
from jax import lax
from jax.experimental import pallas as pl
from jax.experimental.pallas import tpu as pltpu


_ACC_W = 128          # accumulator lane width (one vreg row of lanes)
_MAX_TILE_HW = 8192   # cap on spatial tile (bounds fold-loop unrolling to 64 slices)


def _vmem_budget_and_limit():
    """Generation-aware VMEM tiling budget + scoped limit (v7x: 64 MiB/TC)."""
    cap = 64 * 1024 * 1024
    try:
        info = pltpu.get_tpu_info()
        cap = int(getattr(info, "vmem_capacity_bytes", cap)) or cap
    except Exception:
        pass
    budget = (cap * 3) // 8                           # ~24 MiB v7x, ~48 MiB v5e/v6e
    limit = int(min((cap * 7) // 10, cap - (16 << 20)))
    limit = max(limit, 32 << 20)
    return budget, limit


# ---------------------------------------------------------------------------
# Kernel 1: whole (TB, C, HW) slab is one block -> no accumulators at all.
# ---------------------------------------------------------------------------
def _pool_single_block_kernel(x_ref, sum_ref, max_ref):
    sum_ref[...] = jnp.sum(x_ref[...], axis=-1, keepdims=True, dtype=jnp.float32)
    max_ref[...] = jnp.max(x_ref[...], axis=-1, keepdims=True).astype(jnp.float32)


# ---------------------------------------------------------------------------
# Kernel 2: streamed spatial reduction, small (1, c_blk, 128) f32 accumulators.
# ---------------------------------------------------------------------------
def _pool_tiled_kernel(x_ref, sum_ref, max_ref, sum_acc, max_acc, *,
                       hw, tile_hw, num_tiles):
    k = pl.program_id(2)
    n_fold = tile_hw // _ACC_W
    last_base = (num_tiles - 1) * tile_hw
    has_ragged = (hw % tile_hw) != 0

    @pl.when(k == 0)
    def _init():
        sum_acc[...] = jnp.zeros_like(sum_acc)
        max_acc[...] = jnp.full_like(max_acc, -jnp.inf)

    def _fold(mask_tail):
        # Accumulators held as values across the fold: one scratch load + store
        # per tile (amortized over n_fold input slices); hot loop is pure VPU.
        acc = sum_acc[...]
        macc = max_acc[...]
        for f in range(n_fold):
            start = f * _ACC_W
            if mask_tail and last_base + start >= hw:
                break                                    # slice fully past H*W
            sl = x_ref[:, :, start:start + _ACC_W]       # (1, c_blk, 128)
            if mask_tail and last_base + start + _ACC_W > hw:
                n_valid = hw - (last_base + start)        # trace-time constant
                lane = lax.broadcasted_iota(jnp.int32, sl.shape, 2)
                valid = lane < n_valid
                acc = acc + jnp.where(valid, sl, 0).astype(acc.dtype)
                macc = jnp.maximum(
                    macc, jnp.where(valid, sl, -jnp.inf).astype(macc.dtype))
            else:
                acc = acc + sl.astype(acc.dtype)
                macc = jnp.maximum(macc, sl.astype(macc.dtype))
        sum_acc[...] = acc
        max_acc[...] = macc

    if has_ragged:
        @pl.when(k < num_tiles - 1)
        def _body():
            _fold(False)

        @pl.when(k == num_tiles - 1)
        def _tail():
            _fold(True)
    else:
        _fold(False)

    @pl.when(k == num_tiles - 1)
    def _finalize():
        # Single cross-lane (XLU) reduce per (batch, channel-group).
        sum_ref[...] = jnp.sum(sum_acc[...], axis=-1, keepdims=True)
        max_ref[...] = jnp.max(max_acc[...], axis=-1, keepdims=True)


# ---------------------------------------------------------------------------
# Wrapper: pooling pallas_call + hoisted shared MLP / sigmoid.
# ---------------------------------------------------------------------------
def _pool(x_flat, *, tile_hw=None):
    """Per-channel sum & max over spatial axis. (B, C, HW) -> two (B, C, 1) f32."""
    B, C, HW = x_flat.shape
    itemsize = jnp.dtype(x_flat.dtype).itemsize
    vmem_budget, vmem_limit = _vmem_budget_and_limit()

    out_shape = (jax.ShapeDtypeStruct((B, C, 1), jnp.float32),
                 jax.ShapeDtypeStruct((B, C, 1), jnp.float32))
    cost = pl.CostEstimate(
        flops=int(2 * B * C * HW),
        transcendentals=0,
        bytes_accessed=int(B * C * HW * itemsize + 2 * B * C * 4))

    force_tiled = tile_hw is not None and tile_hw < HW
    row_bytes = C * HW * itemsize

    if not force_tiled and 2 * row_bytes <= vmem_budget:
        # ---- single-block path: batch-blocked grid, no scratch ----
        tb = max(1, min(B, vmem_budget // (2 * row_bytes)))
        while B % tb:
            tb -= 1
        return pl.pallas_call(
            _pool_single_block_kernel,
            out_shape=out_shape,
            grid_spec=pltpu.PrefetchScalarGridSpec(
                num_scalar_prefetch=0,
                grid=(B // tb,),
                in_specs=[pl.BlockSpec((tb, C, HW), lambda b: (b, 0, 0))],
                out_specs=[pl.BlockSpec((tb, C, 1), lambda b: (b, 0, 0)),
                           pl.BlockSpec((tb, C, 1), lambda b: (b, 0, 0))]),
            compiler_params=pltpu.CompilerParams(
                dimension_semantics=("parallel",),
                vmem_limit_bytes=vmem_limit),
            cost_estimate=cost,
        )(x_flat)

    # ---- tiled path: grid = (B, C-groups, spatial tiles) ----
    c_blk = C
    if C > 256:
        for cand in (256, 128, 64, 32, 16, 8):
            if C % cand == 0:
                c_blk = cand
                break
    elif B == 1 and C % 2 == 0 and (C // 2) % 8 == 0:
        c_blk = C // 2       # both v7x TensorCores share one batch's reduction

    acc_bytes = 2 * c_blk * _ACC_W * 4
    if tile_hw is None:
        avail = max(vmem_budget - acc_bytes, 2 * c_blk * _ACC_W * itemsize)
        tile_hw = (avail // (2 * c_blk * itemsize)) // _ACC_W * _ACC_W
    tile_hw = max(_ACC_W, (tile_hw // _ACC_W) * _ACC_W)
    tile_hw = min(tile_hw, _MAX_TILE_HW, pl.cdiv(HW, _ACC_W) * _ACC_W)
    num_tiles = pl.cdiv(HW, tile_hw)

    kernel = functools.partial(_pool_tiled_kernel, hw=HW, tile_hw=tile_hw,
                               num_tiles=num_tiles)
    return pl.pallas_call(
        kernel,
        out_shape=out_shape,
        grid_spec=pltpu.PrefetchScalarGridSpec(
            num_scalar_prefetch=0,
            grid=(B, C // c_blk, num_tiles),
            in_specs=[pl.BlockSpec((1, c_blk, tile_hw), lambda b, c, k: (b, c, k))],
            out_specs=[pl.BlockSpec((1, c_blk, 1), lambda b, c, k: (b, c, 0)),
                       pl.BlockSpec((1, c_blk, 1), lambda b, c, k: (b, c, 0))],
            scratch_shapes=[pltpu.VMEM((1, c_blk, _ACC_W), jnp.float32),
                            pltpu.VMEM((1, c_blk, _ACC_W), jnp.float32)]),
        compiler_params=pltpu.CompilerParams(
            dimension_semantics=("parallel", "parallel", "arbitrary"),
            vmem_limit_bytes=vmem_limit),
        cost_estimate=cost,
    )(x_flat)


def channel_attention(x, w1, w2, *, tile_hw=None):
    """CBAM ChannelAttention forward: sigmoid(MLP(avgpool(x)) + MLP(maxpool(x))).

    x: (B, C, H, W); w1: (C//r, C); w2: (C, C//r). Returns (B, C, 1, 1)."""
    B, C, H, W = x.shape
    HW = H * W
    hidden = w1.shape[0]
    assert w1.shape == (hidden, C) and w2.shape == (C, hidden)

    sum_p, max_p = _pool(x.reshape(B, C, HW), tile_hw=tile_hw)

    # Shared MLP + sigmoid hoisted out of the kernel: one batched matmul pair
    # covers both pooling branches (well-shaped (2B, C) x (C, hidden)).
    avg = sum_p[:, :, 0] * (1.0 / HW)                  # (B, C) f32
    mx = max_p[:, :, 0]                                # (B, C) f32
    pooled = jnp.concatenate([avg, mx], axis=0)        # (2B, C)
    h = jnp.maximum(pooled @ w1.astype(jnp.float32).T, 0.0)
    y = h @ w2.astype(jnp.float32).T                   # (2B, C)
    att = jax.nn.sigmoid(y[:B] + y[B:])
    return att.astype(x.dtype).reshape(B, C, 1, 1)


def xavier_normal(key, shape, gain):
    # nn.init.xavier_normal_ for a Conv2d weight (out, in, 1, 1): fan_in=in, fan_out=out.
    fan_out, fan_in = shape[0], shape[1]
    std = gain * math.sqrt(2.0 / (fan_in + fan_out))
    return std * jax.random.normal(key, shape, dtype=jnp.float32)


if __name__ == "__main__":
    B, C, H, W = 2, 32, 16, 16
    ratio = 8
    hidden = C // ratio

    key = jax.random.PRNGKey(0)
    kx, k1, k2, kx2 = jax.random.split(key, 4)

    x = jax.random.normal(kx, (B, C, H, W), dtype=jnp.float32)
    w1 = xavier_normal(k1, (hidden, C), gain=0.02)   # Conv2d(C, C//r, 1, bias=False)
    w2 = xavier_normal(k2, (C, hidden), gain=0.02)   # Conv2d(C//r, C, 1, bias=False)

    mlp = lambda p: jnp.maximum(p @ w1.T, 0.0) @ w2.T
    ref_fn = lambda xx: jax.nn.sigmoid(
        mlp(jnp.mean(xx, axis=(2, 3))) + mlp(jnp.max(xx, axis=(2, 3)))
    ).reshape(xx.shape[0], xx.shape[1], 1, 1)

    # 1) Single-block (resident) path.
    out = channel_attention(x, w1, w2)
    jax.block_until_ready(out)
    assert jnp.allclose(out, ref_fn(x), atol=1e-5, rtol=1e-5)

    # 2) Tiled + ragged-tail path (HW = 225, 128-lane tiles, masked last slice).
    x2 = jax.random.normal(kx2, (B, C, 15, 15), dtype=jnp.float32)
    out2 = channel_attention(x2, w1, w2, tile_hw=128)
    jax.block_until_ready(out2)
    assert jnp.allclose(out2, ref_fn(x2), atol=1e-5, rtol=1e-5)

    # 3) Tiled exact-multiple path with B=1 (exercises the channel-group split).
    x3 = jax.random.normal(jax.random.PRNGKey(3), (1, C, 16, 32), dtype=jnp.float32)
    out3 = channel_attention(x3, w1, w2, tile_hw=128)
    jax.block_until_ready(out3)
    assert jnp.allclose(out3, ref_fn(x3), atol=1e-5, rtol=1e-5)

    print("KERNEL_OK")
</pallas_src>

<mosaic_0001>
module attributes {stable_mosaic.version = 11 : i64} {
  func.func @_pool_single_block_kernel(%arg0: i32, %arg1: memref<2x32x256xf32, #tpu.memory_space<vmem>>, %arg2: memref<2x32x1xf32, #tpu.memory_space<vmem>>, %arg3: memref<2x32x1xf32, #tpu.memory_space<vmem>>) attributes {dimension_semantics = [#tpu.dimension_semantics<parallel>], iteration_bounds = array<i64: 1>, scalar_prefetch = 0 : i64, scratch_operands = 0 : i64, tpu.core_type = #tpu.core_type<tc>, window_params = [{transform_indices = @transform_0, window_bounds = array<i64: 2, 32, 256>}, {transform_indices = @transform_1, window_bounds = array<i64: 2, 32, 1>}, {transform_indices = @transform_2, window_bounds = array<i64: 2, 32, 1>}]} {
    %c0 = arith.constant 0 : index
    %c0_0 = arith.constant 0 : index
    %c0_1 = arith.constant 0 : index
    %0 = vector.load %arg1[%c0, %c0_0, %c0_1] : memref<2x32x256xf32, #tpu.memory_space<vmem>>, vector<2x32x256xf32>
    %cst = arith.constant dense<0.000000e+00> : vector<2x32xf32>
    %1 = vector.multi_reduction <add>, %0, %cst [2] : vector<2x32x256xf32> to vector<2x32xf32>
    %2 = vector.shape_cast %1 : vector<2x32xf32> to vector<2x32x1xf32>
    %c0_2 = arith.constant 0 : index
    %c0_3 = arith.constant 0 : index
    %c0_4 = arith.constant 0 : index
    %3 = vector.load %arg2[%c0_2, %c0_3, %c0_4] : memref<2x32x1xf32, #tpu.memory_space<vmem>>, vector<2x32x1xf32>
    tpu.vector_store %arg2[%c0_2, %c0_3, %c0_4], %2 {strides = array<i32>} : memref<2x32x1xf32, #tpu.memory_space<vmem>>, vector<2x32x1xf32>,
    %c0_5 = arith.constant 0 : index
    %c0_6 = arith.constant 0 : index
    %c0_7 = arith.constant 0 : index
    %4 = vector.load %arg1[%c0_5, %c0_6, %c0_7] : memref<2x32x256xf32, #tpu.memory_space<vmem>>, vector<2x32x256xf32>
    %cst_8 = arith.constant dense<0xFF800000> : vector<2x32xf32>
    %5 = vector.multi_reduction <maximumf>, %4, %cst_8 [2] : vector<2x32x256xf32> to vector<2x32xf32>
    %6 = vector.shape_cast %5 : vector<2x32xf32> to vector<2x32x1xf32>
    %c0_9 = arith.constant 0 : index
    %c0_10 = arith.constant 0 : index
    %c0_11 = arith.constant 0 : index
    %7 = vector.load %arg3[%c0_9, %c0_10, %c0_11] : memref<2x32x1xf32, #tpu.memory_space<vmem>>, vector<2x32x1xf32>
    tpu.vector_store %arg3[%c0_9, %c0_10, %c0_11], %6 {strides = array<i32>} : memref<2x32x1xf32, #tpu.memory_space<vmem>>, vector<2x32x1xf32>,
    return
  }
  func.func @transform_0(%arg0: i32) -> (i32, i32, i32) {
    %c0_i32 = arith.constant 0 : i32
    %c0_i32_0 = arith.constant 0 : i32
    %c0_i32_1 = arith.constant 0 : i32
    return %arg0, %c0_i32, %c0_i32_0 : i32, i32, i32
  }
  func.func @transform_1(%arg0: i32) -> (i32, i32, i32) {
    %c0_i32 = arith.constant 0 : i32
    %c0_i32_0 = arith.constant 0 : i32
    %c0_i32_1 = arith.constant 0 : i32
    return %arg0, %c0_i32, %c0_i32_0 : i32, i32, i32
  }
  func.func @transform_2(%arg0: i32) -> (i32, i32, i32) {
    %c0_i32 = arith.constant 0 : i32
    %c0_i32_0 = arith.constant 0 : i32
    %c0_i32_1 = arith.constant 0 : i32
    return %arg0, %c0_i32, %c0_i32_0 : i32, i32, i32
  }
}

</mosaic_0001>

<llo_original>
// kernel: tpu_custom_call.1
$region0: #{tpu_custom_call.1}
  #allocation0 [shape = 'u32[]', space=smem, size = 0x4, offset = 0x4, fixed_abs, tag = 'smem constant byte address 0x4 - core index']
  #allocation1 [shape = 'u32[144,128]{1,0:T(1,128)}', space=vmem, size = 0x12000, scoped, tag = 'internal scratch']
  %s0 = inlined_call_operand.hbm [shape: f32[2,32,256], index: 0, kind: input, shape index: {}]
  %s1 = inlined_call_operand.vmem [shape: f32[2,32,1], index: 1, kind: output, shape index: {0}]
  %s2 = inlined_call_operand.vmem [shape: f32[2,32,1], index: 2, kind: output, shape index: {1}]
  %3 = xla_tuple %s1, %s2
  %s4 = sld [smem:[#allocation0]]
  $region26: #{tpu_custom_call.1} parent=0
    _
  %s6 = ssub.s32 1, %s4
  %s7 = scalar_select 0, %s6, %s4
  $region1: #{tpu_custom_call.1} parent=0
    #allocation2 [shape = 'u8[65536]{0}', space=vmem, size = 0x10000, scoped, tag = 'input window, operand 0, single buffered']
    #allocation3 [shape = 's32[1]{0}', space=sflag, size = 0x4, scoped, tag = 'scoped memory for tpu_custom_call.1']
    %8 = vsyncpa [#allocation3], 0
    // Predicated region
    $region2: #{tpu_custom_call.1} parent=1 // pred_check
      _
    $region3: #{tpu_custom_call.1} parent=1 // pred_check_branch
      %10 = sbr.rel (0) target = $region5
    $region4: #{tpu_custom_call.1} parent=1 // pred_region
      %s12 = ssub.s32 2048, 2048
      %13 = vsyncadd [#allocation3], %s12
      %s14 = sshll.u32 [#allocation2], 4
      %s15 = int_to_ptr.vmem [resolvable:$true] %s14
      %20 = dma.hbm_to_vmem [thread:$0]  %s0, 2048, %s15, [#allocation3], 256, 256, 16
    $region5: #{tpu_custom_call.1} parent=1 // pred_fallthru
      _
    // Predicated region
    $region6: #{tpu_custom_call.1} parent=1 // pred_check
      _
    $region7: #{tpu_custom_call.1} parent=1 // pred_check_branch
      %22 = sbr.rel (0) target = $region9
    $region8: #{tpu_custom_call.1} parent=1 // pred_region
      %23 = dma.done [#allocation3], 2048
    $region9: #{tpu_custom_call.1} parent=1 // pred_fallthru
      _
    %v24 = vld [vmem:[#allocation2] sm:$0xff]
    %v25 = vld [vmem:[#allocation2 + $0x8] sm:$0xff]
    %v26 = vld [vmem:[#allocation2 + $0x10] sm:$0xff]
    %v27 = vld [vmem:[#allocation2 + $0x18] sm:$0xff]
    %v28 = vld [vmem:[#allocation2 + $0x20] sm:$0xff]
    %v29 = vld [vmem:[#allocation2 + $0x28] sm:$0xff]
    %v30 = vld [vmem:[#allocation2 + $0x30] sm:$0xff]
    %v31 = vld [vmem:[#allocation2 + $0x38] sm:$0xff]
    %v32 = vld [vmem:[#allocation2 + $0x40] sm:$0xff]
    %v33 = vld [vmem:[#allocation2 + $0x48] sm:$0xff]
    %v34 = vld [vmem:[#allocation2 + $0x50] sm:$0xff]
    %v35 = vld [vmem:[#allocation2 + $0x58] sm:$0xff]
    %v36 = vld [vmem:[#allocation2 + $0x60] sm:$0xff]
    %v37 = vld [vmem:[#allocation2 + $0x68] sm:$0xff]
    %v38 = vld [vmem:[#allocation2 + $0x70] sm:$0xff]
    %v39 = vld [vmem:[#allocation2 + $0x78] sm:$0xff]
    %v40 = vadd.f32 %v24, %v25
    %41 = vadd.xlane.f32.xlu0 %v40
    %v42 = vpop.xlane.xlu0 %41
    %v43 = vadd.f32 %v26, %v27
    %44 = vadd.xlane.f32.xlu0 %v43
    %v45 = vpop.xlane.xlu0 %44
    %v46 = vadd.f32 %v28, %v29
    %47 = vadd.xlane.f32.xlu0 %v46
    %v48 = vpop.xlane.xlu0 %47
    %v49 = vadd.f32 %v30, %v31
    %50 = vadd.xlane.f32.xlu0 %v49
    %v51 = vpop.xlane.xlu0 %50
    %v52 = vadd.f32 %v32, %v33
    %53 = vadd.xlane.f32.xlu0 %v52
    %v54 = vpop.xlane.xlu0 %53
    %v55 = vadd.f32 %v34, %v35
    %56 = vadd.xlane.f32.xlu0 %v55
    %v57 = vpop.xlane.xlu0 %56
    %v58 = vadd.f32 %v36, %v37
    %59 = vadd.xlane.f32.xlu0 %v58
    %v60 = vpop.xlane.xlu0 %59
    %v61 = vadd.f32 %v38, %v39
    %62 = vadd.xlane.f32.xlu0 %v61
    %v63 = vpop.xlane.xlu0 %62
    %vm64 = vcmask 7168
    %65 = vst.msk [vmem:[%s1] sm:$0xff] %vm64, %v42
    %66 = vst.msk [vmem:[%s1 + $0x8] sm:$0xff] %vm64, %v45
    %67 = vst.msk [vmem:[%s1 + $0x10] sm:$0xff] %vm64, %v48
    %68 = vst.msk [vmem:[%s1 + $0x18] sm:$0xff] %vm64, %v51
    %69 = vst.msk [vmem:[%s1 + $0x20] sm:$0xff] %vm64, %v54
    %70 = vst.msk [vmem:[%s1 + $0x28] sm:$0xff] %vm64, %v57
    %71 = vst.msk [vmem:[%s1 + $0x30] sm:$0xff] %vm64, %v60
    %72 = vst.msk [vmem:[%s1 + $0x38] sm:$0xff] %vm64, %v63
    %v73 = vld [vmem:[#allocation2] sm:$0xff]
    %v74 = vld [vmem:[#allocation2 + $0x8] sm:$0xff]
    %v75 = vld [vmem:[#allocation2 + $0x10] sm:$0xff]
    %v76 = vld [vmem:[#allocation2 + $0x18] sm:$0xff]
    %v77 = vld [vmem:[#allocation2 + $0x20] sm:$0xff]
    %v78 = vld [vmem:[#allocation2 + $0x28] sm:$0xff]
    %v79 = vld [vmem:[#allocation2 + $0x30] sm:$0xff]
    %v80 = vld [vmem:[#allocation2 + $0x38] sm:$0xff]
    %v81 = vld [vmem:[#allocation2 + $0x40] sm:$0xff]
    %v82 = vld [vmem:[#allocation2 + $0x48] sm:$0xff]
    %v83 = vld [vmem:[#allocation2 + $0x50] sm:$0xff]
    %v84 = vld [vmem:[#allocation2 + $0x58] sm:$0xff]
    %v85 = vld [vmem:[#allocation2 + $0x60] sm:$0xff]
    %v86 = vld [vmem:[#allocation2 + $0x68] sm:$0xff]
    %v87 = vld [vmem:[#allocation2 + $0x70] sm:$0xff]
    %v88 = vld [vmem:[#allocation2 + $0x78] sm:$0xff]
    %v89 = vmax.f32 %v73, %v74
    %90 = vmax.xlane.f32.xlu0 %v89
    %v91 = vpop.xlane.xlu0 %90
    %v92 = vmax.f32 %v75, %v76
    %93 = vmax.xlane.f32.xlu0 %v92
    %v94 = vpop.xlane.xlu0 %93
    %v95 = vmax.f32 %v77, %v78
    %96 = vmax.xlane.f32.xlu0 %v95
    %v97 = vpop.xlane.xlu0 %96
    %v98 = vmax.f32 %v79, %v80
    %99 = vmax.xlane.f32.xlu0 %v98
    %v100 = vpop.xlane.xlu0 %99
    %v101 = vmax.f32 %v81, %v82
    %102 = vmax.xlane.f32.xlu0 %v101
    %v103 = vpop.xlane.xlu0 %102
    %v104 = vmax.f32 %v83, %v84
    %105 = vmax.xlane.f32.xlu0 %v104
    %v106 = vpop.xlane.xlu0 %105
    %v107 = vmax.f32 %v85, %v86
    %108 = vmax.xlane.f32.xlu0 %v107
    %v109 = vpop.xlane.xlu0 %108
    %v110 = vmax.f32 %v87, %v88
    %111 = vmax.xlane.f32.xlu0 %v110
    %v112 = vpop.xlane.xlu0 %111
    %113 = vst.msk [vmem:[%s2] sm:$0xff] %vm64, %v91
    %114 = vst.msk [vmem:[%s2 + $0x8] sm:$0xff] %vm64, %v94
    %115 = vst.msk [vmem:[%s2 + $0x10] sm:$0xff] %vm64, %v97
    %116 = vst.msk [vmem:[%s2 + $0x18] sm:$0xff] %vm64, %v100
    %117 = vst.msk [vmem:[%s2 + $0x20] sm:$0xff] %vm64, %v103
    %118 = vst.msk [vmem:[%s2 + $0x28] sm:$0xff] %vm64, %v106
    %119 = vst.msk [vmem:[%s2 + $0x30] sm:$0xff] %vm64, %v109
    %120 = vst.msk [vmem:[%s2 + $0x38] sm:$0xff] %vm64, %v112
    // Predicated region
    $region10: #{tpu_custom_call.1} parent=1 // pred_check
      _
    $region11: #{tpu_custom_call.1} parent=1 // pred_check_branch
      %122 = sbr.rel (0) target = $region13
    $region12: #{tpu_custom_call.1} parent=1 // pred_region
      _
    $region13: #{tpu_custom_call.1} parent=1 // pred_fallthru
      _
    // Predicated region
    $region14: #{tpu_custom_call.1} parent=1 // pred_check
      _
    $region15: #{tpu_custom_call.1} parent=1 // pred_check_branch
      %124 = sbr.rel (0) target = $region17
    $region16: #{tpu_custom_call.1} parent=1 // pred_region
      _
    $region17: #{tpu_custom_call.1} parent=1 // pred_fallthru
      _
    // Predicated region
    $region18: #{tpu_custom_call.1} parent=1 // pred_check
      _
    $region19: #{tpu_custom_call.1} parent=1 // pred_check_branch
      %126 = sbr.rel (0) target = $region21
    $region20: #{tpu_custom_call.1} parent=1 // pred_region
      _
    $region21: #{tpu_custom_call.1} parent=1 // pred_fallthru
      _
    // Predicated region
    $region22: #{tpu_custom_call.1} parent=1 // pred_check
      _
    $region23: #{tpu_custom_call.1} parent=1 // pred_check_branch
      %128 = sbr.rel (0) target = $region25
    $region24: #{tpu_custom_call.1} parent=1 // pred_region
      _
    $region25: #{tpu_custom_call.1} parent=1 // pred_fallthru
      _
    %129 = vsyncpa [#allocation3], 1

</llo_original>
